<compile_context>
chip_gen: v7x
topology: tpu7x:2x2x1
jax: 0.10.0
libtpu: 0.0.40
codegen_flags: <defaults>
</compile_context>

<pallas_src>
import jax
import jax.numpy as jnp
from jax.experimental import pallas as pl
from jax.experimental.pallas import tpu as pltpu

_LANE = 128
_SUBLANE = 8


def _round_up(n, m):
    return ((n + m - 1) // m) * m


# ---------------------------------------------------------------------------
# Kernels
# ---------------------------------------------------------------------------
def _fused_linear_kernel(x_ref, w_ref, b_ref, o_ref):
    """Single MXU pass: y = x @ W + b  (W = Wa^T Wt^T Wb^T, pre-fused)."""
    acc = jnp.dot(x_ref[...], w_ref[...], preferred_element_type=jnp.float32)
    o_ref[...] = (acc + b_ref[...]).astype(o_ref.dtype)


def _factored_linear_kernel(x_ref, w1_ref, b1_ref, w2_ref, b2_ref, o_ref):
    """Two chained MXU passes preserving the low-rank factorization.

    h = x @ W1 + b1   (W1 = Wa^T Wt^T, zero-padded to rank_pad lanes)
    y = h @ W2 + b2   (W2 = Wb^T, zero-padded rows -> padded lanes of h inert)
    """
    h = jnp.dot(x_ref[...], w1_ref[...], preferred_element_type=jnp.float32)
    h = (h + b1_ref[...]).astype(w2_ref.dtype)
    acc = jnp.dot(h, w2_ref[...], preferred_element_type=jnp.float32)
    o_ref[...] = (acc + b2_ref[...]).astype(o_ref.dtype)


# ---------------------------------------------------------------------------
# One-time parameter preparation (hoisted out of the per-call path)
# ---------------------------------------------------------------------------
def prepare_low_rank_params(w_a, b_a, w_t, b_t, w_b, b_b, *,
                            compute_dtype=jnp.float32, mode="auto"):
    """Fuse / pad the three Linear layers once.

    PyTorch nn.Linear convention:
      w_a: (rank, in_dim)   b_a: (rank,)    -- A (weight = low_rank_init, bias zeroed)
      w_t: (rank, rank)     b_t: (rank,)    -- T
      w_b: (out_dim, rank)  b_b: (out_dim,) -- B
    """
    compute_dtype = jnp.dtype(compute_dtype)
    if compute_dtype not in (jnp.dtype(jnp.float32), jnp.dtype(jnp.bfloat16)):
        raise ValueError("compute_dtype must be float32 or bfloat16 (MXU float path only)")

    rank, in_dim = w_a.shape
    out_dim = w_b.shape[0]
    f32 = jnp.float32

    b_a = jnp.reshape(b_a, (1, -1)).astype(f32)
    b_t = jnp.reshape(b_t, (1, -1)).astype(f32)
    b_b = jnp.reshape(b_b, (1, -1)).astype(f32)

    # Stage-1 fusion (A then T), kept factored from B:
    #   h = x @ W1 + b1,  W1 = Wa^T Wt^T (in_dim, rank),  b1 = ba Wt^T + bt
    w1 = w_a.astype(f32).T @ w_t.astype(f32).T          # (in_dim, rank)
    b1 = b_a @ w_t.astype(f32).T + b_t                  # (1, rank)
    w2 = w_b.astype(f32).T                               # (rank, out_dim)
    b2 = b_b                                             # (1, out_dim)

    # Output width: pad to a 128-lane multiple only when the extra writeback
    # is <= 12.5%; otherwise masked stores on the true width win.
    out_w = _round_up(out_dim, _LANE)
    if out_w != out_dim and (out_w - out_dim) * 8 > out_dim:
        out_w = out_dim

    rank_pad = _round_up(rank, _LANE)
    itemsize = compute_dtype.itemsize

    if mode == "auto":
        fused_w_bytes = in_dim * out_w * itemsize
        # MXU work per row: fused = in_dim*out_dim, factored = (in_dim+out_dim)*rank_pad
        fused_cheaper = in_dim * out_dim <= (in_dim + out_dim) * rank_pad
        mode = "fused" if (fused_cheaper and fused_w_bytes <= (2 << 20)) else "factored"

    params = dict(mode=mode, in_dim=in_dim, out_dim=out_dim, out_w=out_w,
                  rank_pad=rank_pad)

    if mode == "fused":
        w = (w1 @ w2).astype(compute_dtype)              # (in_dim, out_dim)
        b = b1 @ w2 + b2                                 # (1, out_dim) f32 epilogue
        if out_w != out_dim:
            w = jnp.pad(w, ((0, 0), (0, out_w - out_dim)))
            b = jnp.pad(b, ((0, 0), (0, out_w - out_dim)))
        params.update(w=w, b=b)
    else:
        w1p = jnp.pad(w1, ((0, 0), (0, rank_pad - rank))).astype(compute_dtype)
        b1p = jnp.pad(b1, ((0, 0), (0, rank_pad - rank)))                       # f32
        w2p = jnp.pad(w2, ((0, rank_pad - rank), (0, out_w - out_dim))).astype(compute_dtype)
        b2p = jnp.pad(b2, ((0, 0), (0, out_w - out_dim)))                       # f32
        params.update(w1=w1p, b1=b1p, w2=w2p, b2=b2p)
    return params


# ---------------------------------------------------------------------------
# Forward
# ---------------------------------------------------------------------------
def _pick_tile(batch, row_bytes, resident_bytes, *, budget=24 << 20, cap=2048):
    # Whole batch as one block when it fits (no per-grid-step overhead).
    if batch <= cap and batch * row_bytes + resident_bytes <= budget:
        return int(batch)
    t = (budget - resident_bytes) // max(row_bytes, 1)
    t = max(_SUBLANE, min(cap, (t // _SUBLANE) * _SUBLANE))
    return int(t)


def low_rank_block_forward(x, params, *, tile_b=None):
    """y = B(T(A(x))) using prepared params (see prepare_low_rank_params)."""
    if jnp.dtype(x.dtype) not in (jnp.dtype(jnp.float32), jnp.dtype(jnp.bfloat16)):
        raise ValueError("x must be float32 or bfloat16")
    batch, in_dim = x.shape
    assert in_dim == params["in_dim"], "input feature dim mismatch"
    out_dim, out_w = params["out_dim"], params["out_w"]
    mode = params["mode"]
    itemsize = jnp.dtype(x.dtype).itemsize

    if mode == "fused":
        weights = (params["w"], params["b"])
        kernel = _fused_linear_kernel
        w_specs = [
            pl.BlockSpec((in_dim, out_w), lambda i: (0, 0)),   # fused W (resident)
            pl.BlockSpec((1, out_w), lambda i: (0, 0)),        # fused bias (f32)
        ]
        row_bytes = 2 * (in_dim + out_w) * itemsize + out_w * 4
    else:
        rank_pad = params["rank_pad"]
        weights = (params["w1"], params["b1"], params["w2"], params["b2"])
        kernel = _factored_linear_kernel
        w_specs = [
            pl.BlockSpec((in_dim, rank_pad), lambda i: (0, 0)),   # W1 (resident)
            pl.BlockSpec((1, rank_pad), lambda i: (0, 0)),        # b1 (f32)
            pl.BlockSpec((rank_pad, out_w), lambda i: (0, 0)),    # W2 (resident)
            pl.BlockSpec((1, out_w), lambda i: (0, 0)),           # b2 (f32)
        ]
        row_bytes = 2 * (in_dim + out_w) * itemsize + (rank_pad + out_w) * 4

    # Resident weights are double-buffered by the pipeline: budget for 2x.
    resident = 2 * sum(int(a.size) * a.dtype.itemsize for a in weights)

    if tile_b is None:
        tile = _pick_tile(batch, row_bytes, resident)
    else:
        tile = min(int(tile_b), batch)
        if tile < batch:
            tile = max(_SUBLANE, (tile // _SUBLANE) * _SUBLANE)

    grid = (pl.cdiv(batch, tile),)

    est_vmem = resident + tile * row_bytes
    vmem_limit = int(min(max(est_vmem + (8 << 20), 16 << 20), 48 << 20))

    y = pl.pallas_call(
        kernel,
        out_shape=jax.ShapeDtypeStruct((batch, out_w), x.dtype),
        grid=grid,
        in_specs=[pl.BlockSpec((tile, in_dim), lambda i: (i, 0))] + w_specs,
        out_specs=pl.BlockSpec((tile, out_w), lambda i: (i, 0)),
        compiler_params=pltpu.CompilerParams(
            dimension_semantics=("parallel",),   # shards batch tiles across v7x's 2 TCs
            vmem_limit_bytes=vmem_limit,
        ),
    )(x, *weights)

    # TODO(synk): for extremely wide out_dim (resident W2 exceeding the VMEM
    # budget) add an N grid axis tiling out_w; unnecessary for typical low-rank shapes.
    return y if out_w == out_dim else y[:, :out_dim]


def reference_forward(x, w_a, b_a, w_t, b_t, w_b, b_b):
    h1 = x @ w_a.T + jnp.reshape(b_a, (1, -1))
    h2 = h1 @ w_t.T + jnp.reshape(b_t, (1, -1))
    return h2 @ w_b.T + jnp.reshape(b_b, (1, -1))


if __name__ == "__main__":
    # Small shapes consistent with the module: Linear chain in_dim -> rank -> out_dim
    in_dim, rank, out_dim = 32, 16, 24

    key = jax.random.PRNGKey(0)
    k_x1, k_x2, k_lri, k_wt, k_bt, k_wb, k_bb = jax.random.split(key, 7)

    # A.weight copied from low_rank_init; A.bias zeroed (as in the module).
    low_rank_init = jax.random.normal(k_lri, (rank, in_dim), dtype=jnp.float32) * 0.1
    w_a = low_rank_init
    b_a = jnp.zeros((rank,), dtype=jnp.float32)

    # T and B: deterministic uniform init mimicking nn.Linear defaults.
    lim = 1.0 / jnp.sqrt(rank)
    w_t = jax.random.uniform(k_wt, (rank, rank), minval=-lim, maxval=lim, dtype=jnp.float32)
    b_t = jax.random.uniform(k_bt, (rank,), minval=-lim, maxval=lim, dtype=jnp.float32)
    w_b = jax.random.uniform(k_wb, (out_dim, rank), minval=-lim, maxval=lim, dtype=jnp.float32)
    b_b = jax.random.uniform(k_bb, (out_dim,), minval=-lim, maxval=lim, dtype=jnp.float32)

    # One-time parameter prep (hoisted out of the per-call path).
    params_auto = prepare_low_rank_params(w_a, b_a, w_t, b_t, w_b, b_b)              # tiny dims -> fused
    params_fact = prepare_low_rank_params(w_a, b_a, w_t, b_t, w_b, b_b, mode="factored")

    # Test 1: tiny batch, auto-dispatched (fused) path, single block.
    x1 = jax.random.normal(k_x1, (8, in_dim), dtype=jnp.float32)
    y1 = low_rank_block_forward(x1, params_auto)
    jax.block_until_ready(y1)
    y1_ref = reference_forward(x1, w_a, b_a, w_t, b_t, w_b, b_b)
    assert y1.shape == (8, out_dim)
    assert jnp.allclose(y1, y1_ref, atol=1e-4, rtol=1e-4), "mismatch (fused, batch=8)"

    # Test 2: non-multiple batch with an explicit small tile -> multi-step grid
    # with a partial boundary block; factored (low-rank preserving) kernel.
    x2 = jax.random.normal(k_x2, (300, in_dim), dtype=jnp.float32)
    y2 = low_rank_block_forward(x2, params_fact, tile_b=128)
    jax.block_until_ready(y2)
    y2_ref = reference_forward(x2, w_a, b_a, w_t, b_t, w_b, b_b)
    assert y2.shape == (300, out_dim)
    assert jnp.allclose(y2, y2_ref, atol=1e-4, rtol=1e-4), "mismatch (factored, batch=300)"

    # Test 3: same batch, auto tiling -> whole batch as one block (no grid overhead).
    y3 = low_rank_block_forward(x2, params_auto)
    jax.block_until_ready(y3)
    assert jnp.allclose(y3, y2_ref, atol=1e-4, rtol=1e-4), "mismatch (fused, batch=300)"

    print("KERNEL_OK")
</pallas_src>

<mosaic_0001>
module attributes {stable_mosaic.version = 11 : i64} {
  func.func @_fused_linear_kernel(%arg0: i32, %arg1: memref<8x32xf32, #tpu.memory_space<vmem>>, %arg2: memref<32x24xf32, #tpu.memory_space<vmem>>, %arg3: memref<1x24xf32, #tpu.memory_space<vmem>>, %arg4: memref<8x24xf32, #tpu.memory_space<vmem>>) attributes {dimension_semantics = [#tpu.dimension_semantics<parallel>], iteration_bounds = array<i64: 1>, scalar_prefetch = 0 : i64, scratch_operands = 0 : i64, tpu.core_type = #tpu.core_type<tc>, window_params = [{transform_indices = @transform_0, window_bounds = array<i64: 8, 32>}, {pipeline_mode = #tpu.pipeline_mode<synchronous>, transform_indices = @transform_1, window_bounds = array<i64: 32, 24>}, {pipeline_mode = #tpu.pipeline_mode<synchronous>, transform_indices = @transform_2, window_bounds = array<i64: 1, 24>}, {transform_indices = @transform_3, window_bounds = array<i64: 8, 24>}]} {
    %c0 = arith.constant 0 : index
    %c0_0 = arith.constant 0 : index
    %0 = vector.load %arg1[%c0, %c0_0] : memref<8x32xf32, #tpu.memory_space<vmem>>, vector<8x32xf32>
    %c0_1 = arith.constant 0 : index
    %c0_2 = arith.constant 0 : index
    %1 = vector.load %arg2[%c0_1, %c0_2] : memref<32x24xf32, #tpu.memory_space<vmem>>, vector<32x24xf32>
    %cst = arith.constant dense<0.000000e+00> : vector<8x24xf32>
    %2 = tpu.matmul %0, %1, %cst {dimension_numbers = #tpu.dot_dimension_numbers<[1], [0], [0], [1], [0, 0, 1, 1], [], []>} : vector<8x32xf32>, vector<32x24xf32>, vector<8x24xf32> -> vector<8x24xf32>
    %c0_3 = arith.constant 0 : index
    %c0_4 = arith.constant 0 : index
    %3 = vector.load %arg3[%c0_3, %c0_4] : memref<1x24xf32, #tpu.memory_space<vmem>>, vector<1x24xf32>
    %4 = vector.broadcast %3 : vector<1x24xf32> to vector<8x24xf32>
    %5 = arith.addf %2, %4 : vector<8x24xf32>
    %c0_5 = arith.constant 0 : index
    %c0_6 = arith.constant 0 : index
    %6 = vector.load %arg4[%c0_5, %c0_6] : memref<8x24xf32, #tpu.memory_space<vmem>>, vector<8x24xf32>
    tpu.vector_store %arg4[%c0_5, %c0_6], %5 {strides = array<i32>} : memref<8x24xf32, #tpu.memory_space<vmem>>, vector<8x24xf32>,
    return
  }
  func.func @transform_0(%arg0: i32) -> (i32, i32) {
    %c0_i32 = arith.constant 0 : i32
    %c0_i32_0 = arith.constant 0 : i32
    return %arg0, %c0_i32 : i32, i32
  }
  func.func @transform_1(%arg0: i32) -> (i32, i32) {
    %c0_i32 = arith.constant 0 : i32
    %c0_i32_0 = arith.constant 0 : i32
    %c0_i32_1 = arith.constant 0 : i32
    return %c0_i32, %c0_i32_0 : i32, i32
  }
  func.func @transform_2(%arg0: i32) -> (i32, i32) {
    %c0_i32 = arith.constant 0 : i32
    %c0_i32_0 = arith.constant 0 : i32
    %c0_i32_1 = arith.constant 0 : i32
    return %c0_i32, %c0_i32_0 : i32, i32
  }
  func.func @transform_3(%arg0: i32) -> (i32, i32) {
    %c0_i32 = arith.constant 0 : i32
    %c0_i32_0 = arith.constant 0 : i32
    return %arg0, %c0_i32 : i32, i32
  }
}

</mosaic_0001>

<llo_original>
// kernel: tpu_custom_call.1
$region0: #{tpu_custom_call.1}
  #allocation0 [shape = 'u32[]', space=smem, size = 0x4, offset = 0x4, fixed_abs, tag = 'smem constant byte address 0x4 - core index']
  #allocation1 [shape = 'u32[144,128]{1,0:T(1,128)}', space=vmem, size = 0x12000, scoped, tag = 'internal scratch']
  %s0 = inlined_call_operand.vmem [shape: f32[8,32], index: 0, kind: input, shape index: {}]
  %s1 = inlined_call_operand.vmem [shape: f32[32,24], index: 1, kind: input, shape index: {}]
  %s2 = inlined_call_operand.vmem [shape: f32[1,24], index: 2, kind: input, shape index: {}]
  %s3 = inlined_call_operand.hbm [shape: f32[8,24], index: 3, kind: output, shape index: {}]
  %s4 = sld [smem:[#allocation0]]
  $region22: #{tpu_custom_call.1} parent=0
    _
  %s6 = ssub.s32 1, %s4
  %s7 = scalar_select 0, %s6, %s4
  $region1: #{tpu_custom_call.1} parent=0
    #allocation2 [shape = 'u8[4096]{0}', space=vmem, size = 0x1000, scoped, tag = 'output window, operand 0, single buffered']
    #allocation3 [shape = 's32[1]{0}', space=sflag, size = 0x4, scoped, tag = 'scoped memory for tpu_custom_call.1']
    %8 = vsyncpa [#allocation3], 0
    // Predicated region
    $region2: #{tpu_custom_call.1} parent=1 // pred_check
      _
    $region3: #{tpu_custom_call.1} parent=1 // pred_check_branch
      %10 = sbr.rel (0) target = $region5
    $region4: #{tpu_custom_call.1} parent=1 // pred_region
      _
    $region5: #{tpu_custom_call.1} parent=1 // pred_fallthru
      _
    // Predicated region
    $region6: #{tpu_custom_call.1} parent=1 // pred_check
      _
    $region7: #{tpu_custom_call.1} parent=1 // pred_check_branch
      %12 = sbr.rel (0) target = $region9
    $region8: #{tpu_custom_call.1} parent=1 // pred_region
      _
    $region9: #{tpu_custom_call.1} parent=1 // pred_fallthru
      _
    // Predicated region
    $region10: #{tpu_custom_call.1} parent=1 // pred_check
      _
    $region11: #{tpu_custom_call.1} parent=1 // pred_check_branch
      %14 = sbr.rel (0) target = $region13
    $region12: #{tpu_custom_call.1} parent=1 // pred_region
      _
    $region13: #{tpu_custom_call.1} parent=1 // pred_fallthru
      _
    %v15 = vld [vmem:[%s0] sm:$0xff]
    %v16 = vld [vmem:[%s1] sm:$0xff]
    %v17 = vld [vmem:[%s1 + $0x8] sm:$0xff]
    %v18 = vld [vmem:[%s1 + $0x10] sm:$0xff]
    %v19 = vld [vmem:[%s1 + $0x18] sm:$0xff]
    %v20 = vld [vmem:[%s2] sm:$0x1]
    %v22 = vlaneseq
    %v23 = vshrl.u32 %v22, 7
    %v24 = vsub.s32 0, %v23
    %v25 = vrot.slane %v20, %v24
    %vm27 = vcmask 261120
    %v29 = vsel %vm27, %v15, 0
    %31 = vmatprep.subr.mxu0 0.0
    %32 = vmatpush1.msra.mxu0 %v16
    %33 = vmatprep.subr.mxu0 0.0
    %34 = vmatpush1.msra.mxu0 %v17
    %35 = vmatprep.subr.mxu0 0.0
    %36 = vmatpush1.msra.mxu0 %v18
    %37 = vmatprep.subr.mxu0 0.0
    %38 = vmatpush1.msra.mxu0 %v19
    %39 = vmatprep.subr.mxu0 0.0
    %40 = vmatpush1.msra.mxu0 0.0
    %41 = vmatprep.subr.mxu0 0.0
    %42 = vmatpush1.msra.mxu0 0.0
    %43 = vmatprep.subr.mxu0 0.0
    %44 = vmatpush1.msra.mxu0 0.0
    %45 = vmatprep.subr.mxu0 0.0
    %46 = vmatpush1.msra.mxu0 0.0
    %47 = vmatprep.subr.mxu0 0.0
    %48 = vmatpush1.msra.mxu0 0.0
    %49 = vmatprep.subr.mxu0 0.0
    %50 = vmatpush1.msra.mxu0 0.0
    %51 = vmatprep.subr.mxu0 0.0
    %52 = vmatpush1.msra.mxu0 0.0
    %53 = vmatprep.subr.mxu0 0.0
    %54 = vmatpush1.msra.mxu0 0.0
    %55 = vmatprep.subr.mxu0 0.0
    %56 = vmatpush1.msra.mxu0 0.0
    %57 = vmatprep.subr.mxu0 0.0
    %58 = vmatpush1.msra.mxu0 0.0
    %59 = vmatprep.subr.mxu0 0.0
    %60 = vmatpush1.msra.mxu0 0.0
    %61 = vmatprep.subr.mxu0 0.0
    %62 = vmatpush1.msra.mxu0 0.0
    %63 = vmatprep.subr.mxu0 0.0
    %64 = vmatpush1.msra.mxu0 0.0
    %65 = vmatprep.subr.mxu0 0.0
    %66 = vmatpush1.msra.mxu0 0.0
    %67 = vmatprep.subr.mxu0 0.0
    %68 = vmatpush1.msra.mxu0 0.0
    %69 = vmatprep.subr.mxu0 0.0
    %70 = vmatpush1.msra.mxu0 0.0
    %71 = vmatprep.subr.mxu0 0.0
    %72 = vmatpush1.msra.mxu0 0.0
    %73 = vmatprep.subr.mxu0 0.0
    %74 = vmatpush1.msra.mxu0 0.0
    %75 = vmatprep.subr.mxu0 0.0
    %76 = vmatpush1.msra.mxu0 0.0
    %77 = vmatprep.subr.mxu0 0.0
    %78 = vmatpush1.msra.mxu0 0.0
    %79 = vmatprep.subr.mxu0 0.0
    %80 = vmatpush1.msra.mxu0 0.0
    %81 = vmatprep.subr.mxu0 0.0
    %82 = vmatpush1.msra.mxu0 0.0
    %83 = vmatprep.subr.mxu0 0.0
    %84 = vmatpush1.msra.mxu0 0.0
    %85 = vmatprep.subr.mxu0 0.0
    %86 = vmatpush1.msra.mxu0 0.0
    %87 = vmatprep.subr.mxu0 0.0
    %88 = vmatpush1.msra.mxu0 0.0
    %89 = vmatprep.subr.mxu0 0.0
    %90 = vmatpush1.msra.mxu0 0.0
    %91 = vmatprep.subr.mxu0 0.0
    %92 = vmatpush1.msra.mxu0 0.0
    %93 = vmatprep.subr.mxu0 0.0
    %94 = vmatpush1.msra.mxu0 0.0
    %95 = vmatprep.mubr.f32.mxu0 0.0
    %96 = vmatmul.mubr.f32.gmra.mrb[0].mxu0 %v29
    %v97 = vpop.f32.mrb[0].mxu0
    %v98 = vadd.f32 %v25, %v97
    %v99 = vpop.f32.mrb[0].mxu0
    %100 = vdwg.mxu0
    %vm101 = vcmask 195584
    %102 = vst.msk [vmem:[#allocation2] sm:$0xff] %vm101, %v98
    // Predicated region
    $region14: #{tpu_custom_call.1} parent=1 // pred_check
      _
    $region15: #{tpu_custom_call.1} parent=1 // pred_check_branch
      %104 = sbr.rel (0) target = $region17
    $region16: #{tpu_custom_call.1} parent=1 // pred_region
      %s106 = ssub.s32 128, 128
      %107 = vsyncadd [#allocation3], %s106
      %s109 = sshll.u32 [#allocation2], 4
      %s110 = int_to_ptr.vmem [resolvable:$true] %s109
      %112 = dma.vmem_to_hbm [thread:$0]  %s110, 128, %s3, [#allocation3]
    $region17: #{tpu_custom_call.1} parent=1 // pred_fallthru
      _
    // Predicated region
    $region18: #{tpu_custom_call.1} parent=1 // pred_check
      _
    $region19: #{tpu_custom_call.1} parent=1 // pred_check_branch
      %114 = sbr.rel (0) target = $region21
    $region20: #{tpu_custom_call.1} parent=1 // pred_region
      %115 = dma.done [#allocation3], 128
    $region21: #{tpu_custom_call.1} parent=1 // pred_fallthru
      _
    %116 = vsyncpa [#allocation3], 1

</llo_original>
